<compile_context>
chip_gen: v5e
topology: v5e:2x2
jax: 0.10.0
libtpu: 0.0.40
codegen_flags: <defaults>
</compile_context>

<pallas_src>
import functools

import jax
import jax.numpy as jnp
from jax import lax
from jax.experimental import pallas as pl
from jax.experimental.pallas import tpu as pltpu

_HALO = 8  # halo rows per side, padded to a full sublane group


# ----------------------------------------------------------------------------
# Kernel
# ----------------------------------------------------------------------------
def convnext_block_kernel(x_ref, lh_ref, rh_ref, w_dw_ref, b_dw_ref,
                          w1_ref, b1_ref, w2_ref, b2_ref, o_ref, *,
                          kernel_size, padding, eps, matmul_dtype,
                          i_chunk, gelu_approx):
    f32 = jnp.float32
    xc = x_ref[0].astype(f32)            # (tT, C) center tile (also the residual)
    lh = lh_ref[0, 0].astype(f32)        # (8, C)  left halo (zeros past the edge)
    rh = rh_ref[0, 0].astype(f32)        # (8, C)  right halo (zeros past the edge)
    tT = xc.shape[0]
    p = padding

    # --- depthwise Conv1d (groups == C) --------------------------------------
    # All three pieces are multiples of 8 sublanes, so the concat is aligned and
    # the center tap (k == p) slice lands at a multiple-of-8 offset.
    win = jnp.concatenate([lh, xc, rh], axis=0)      # (tT + 16, C)
    w_dw = w_dw_ref[...].astype(f32)                 # (K, C), cast hoisted out of loop
    acc = xc * w_dw[p]                               # aligned center tap
    for k in range(kernel_size):
        if k == p:
            continue
        off = _HALO - p + k
        # TODO(synk): misaligned sublane slice; could be a pltpu.roll (XLU) instead.
        acc = acc + win[off:off + tT] * w_dw[k]
    acc = acc + b_dw_ref[0].astype(f32)

    # --- LayerNorm over channels (affine folded into w1/b1 by the wrapper) ---
    mean = jnp.mean(acc, axis=-1, keepdims=True)
    var = jnp.mean(jnp.square(acc - mean), axis=-1, keepdims=True)
    xn = ((acc - mean) * lax.rsqrt(var + eps)).astype(matmul_dtype)

    # --- pwconv1 -> GELU -> pwconv2, chunked over the intermediate dim -------
    I = w1_ref.shape[1]
    y = None
    for c0 in range(0, I, i_chunk):
        csz = min(i_chunk, I - c0)
        h = jnp.dot(xn, w1_ref[:, pl.ds(c0, csz)],
                    preferred_element_type=f32)
        h = h + b1_ref[0, pl.ds(c0, csz)].astype(f32)
        if gelu_approx:
            g = jax.nn.gelu(h, approximate=True)     # tanh path -> EUP slot
        else:
            g = 0.5 * h * (1.0 + lax.erf(h * jnp.float32(0.7071067811865476)))
        yk = jnp.dot(g.astype(matmul_dtype), w2_ref[pl.ds(c0, csz), :],
                     preferred_element_type=f32)
        y = yk if y is None else y + yk
    y = y + b2_ref[0].astype(f32)                    # gamma already folded in

    # --- residual -------------------------------------------------------------
    o_ref[0] = (xc + y).astype(o_ref.dtype)


# ----------------------------------------------------------------------------
# Sizing heuristics (generation-aware)
# ----------------------------------------------------------------------------
def _round_up(x, m):
    return -(-x // m) * m


def _tpu_vmem_bytes(default=64 * 1024 * 1024):
    try:
        info = pltpu.get_tpu_info()
        for name in ("vmem_capacity_bytes", "vmem_size_bytes", "vmem_bytes"):
            v = getattr(info, name, None)
            if v:
                return int(v)
    except Exception:
        pass
    return default  # conservative (v7x per-core VMEM)


def _pick_i_chunk(I, vmem_cap, tT_hint=512):
    """Chunk the intermediate dim so the f32 (tT, I_chunk) h/g slabs stay small."""
    budget = max(vmem_cap // 8, 4 * 1024 * 1024)     # ~8 MiB on v7x, ~16 MiB on v6e
    if I <= 128 or 2 * 4 * tT_hint * I <= budget:
        return int(I)
    chunk = (budget // (2 * 4 * tT_hint)) // 128 * 128
    return int(max(128, min(I, chunk)))


def _pick_time_tile(T, C, I, i_chunk, mm_bytes, x_bytes, vmem_cap):
    """Largest multiple-of-8 time tile (<=512, MXU-sized) whose working set fits
    ~70% of this generation's VMEM after subtracting the single-buffered weights."""
    budget = int(0.70 * vmem_cap)
    weights = 2 * C * I * mm_bytes + 4 * (16 * C + 2 * I)   # w1+w2 + small vectors
    avail = max(budget - weights, 4 * 1024 * 1024)
    per_row = (
        2 * C * x_bytes              # double-buffered input tile
        + 2 * C * x_bytes            # double-buffered output tile
        + 4 * 5 * C                  # window / acc / xn / y / residual (f32)
        + 4 * 2 * i_chunk            # h and gelu(h) per chunk (f32)
        + mm_bytes * (C + i_chunk)   # bf16 operands fed to the MXU
    )
    cap = max(8, (avail // per_row) // 8 * 8)
    tT = int(min(512, cap))                      # >=256 whenever the budget allows
    tT = min(tT, _round_up(T, 8))                # never tile longer than the sequence
    return max(8, tT)


def _vmem_limit_bytes(tT, C, I, i_chunk, K, mm_bytes, x_bytes, vmem_cap):
    tiles = 2 * (2 * tT * C * x_bytes)                       # in + out, double-buffered
    halos = 2 * 2 * _HALO * C * x_bytes
    weights = 2 * C * I * mm_bytes + 4 * ((K + 8) * C + 2 * I)
    work = 4 * (6 * tT * C + 2 * tT * i_chunk) + mm_bytes * tT * (C + i_chunk)
    est = tiles + halos + weights + work + (2 << 20)
    lim = max(int(1.4 * est), 32 * 1024 * 1024)
    return int(min(lim, int(0.92 * vmem_cap)))


# ----------------------------------------------------------------------------
# Wrappers
# ----------------------------------------------------------------------------
def convnext_block_channels_last(x_cl, params, *, kernel_size, padding, eps=1e-6,
                                 time_tile=None, matmul_dtype=jnp.bfloat16,
                                 i_chunk=None, gelu_approx=False):
    """x_cl: (B, T, C). Channels-last entry point (chain blocks without transposes)."""
    B, T, C = x_cl.shape
    assert kernel_size - 1 == 2 * padding, "expect 'same' depthwise conv"
    assert padding <= _HALO, "halo block only covers padding <= 8"
    I = params["w1"].shape[1]

    vmem_cap = _tpu_vmem_bytes()
    mm_bytes = jnp.dtype(matmul_dtype).itemsize
    x_bytes = jnp.dtype(x_cl.dtype).itemsize

    if i_chunk is None:
        i_chunk = _pick_i_chunk(I, vmem_cap)
    i_chunk = int(max(1, min(i_chunk, I)))
    if time_tile is None:
        time_tile = _pick_time_tile(T, C, I, i_chunk, mm_bytes, x_bytes, vmem_cap)
    tT = int(time_tile)
    assert tT % 8 == 0, "time tile must be a multiple of 8 (sublane granularity)"

    nT = pl.cdiv(T, tT)
    T_pad = nT * tT
    x_cl_p = x_cl if T_pad == T else jnp.pad(x_cl, ((0, 0), (0, T_pad - T), (0, 0)))

    # Halo rows (8-sublane padded) via one pad + reshape -- no gathers.
    xp = jnp.pad(x_cl_p, ((0, 0), (_HALO, tT + _HALO), (0, 0)))
    lhalo = xp[:, :T_pad, :].reshape(B, nT, tT, C)[:, :, :_HALO, :]
    rhalo = xp[:, _HALO + tT:_HALO + tT + T_pad, :].reshape(B, nT, tT, C)[:, :, :_HALO, :]

    # Fold LayerNorm affine into pwconv1 and layer scale into pwconv2 (in f32,
    # before any bf16 cast of the matmul weights).
    f32 = jnp.float32
    ln_w = params["ln_w"].astype(f32).reshape(1, C)
    ln_b = params["ln_b"].astype(f32).reshape(1, C)
    gamma = params["gamma"].astype(f32).reshape(1, C)
    w1 = params["w1"].astype(f32)
    b1 = params["b1"].astype(f32).reshape(1, I)
    w2 = params["w2"].astype(f32)
    b2 = params["b2"].astype(f32).reshape(1, C)
    w1f = (ln_w.reshape(C, 1) * w1).astype(matmul_dtype)
    b1f = ln_b @ w1 + b1
    w2f = (w2 * gamma).astype(matmul_dtype)
    b2f = b2 * gamma

    kern = functools.partial(
        convnext_block_kernel, kernel_size=kernel_size, padding=padding, eps=eps,
        matmul_dtype=matmul_dtype, i_chunk=i_chunk, gelu_approx=gelu_approx)

    single = pl.Buffered(1)  # constant-index operands: no double buffering
    out_cl = pl.pallas_call(
        kern,
        out_shape=jax.ShapeDtypeStruct((B, T_pad, C), x_cl.dtype),
        grid=(nT, B),
        in_specs=[
            pl.BlockSpec((1, tT, C), lambda t, b: (b, t, 0)),              # x tile
            pl.BlockSpec((1, 1, _HALO, C), lambda t, b: (b, t, 0, 0)),     # left halo
            pl.BlockSpec((1, 1, _HALO, C), lambda t, b: (b, t, 0, 0)),     # right halo
            pl.BlockSpec((kernel_size, C), lambda t, b: (0, 0), pipeline_mode=single),
            pl.BlockSpec((1, C), lambda t, b: (0, 0), pipeline_mode=single),   # b_dw
            pl.BlockSpec((C, I), lambda t, b: (0, 0), pipeline_mode=single),   # w1'
            pl.BlockSpec((1, I), lambda t, b: (0, 0), pipeline_mode=single),   # b1'
            pl.BlockSpec((I, C), lambda t, b: (0, 0), pipeline_mode=single),   # w2'
            pl.BlockSpec((1, C), lambda t, b: (0, 0), pipeline_mode=single),   # b2'
        ],
        out_specs=pl.BlockSpec((1, tT, C), lambda t, b: (b, t, 0)),
        compiler_params=pltpu.CompilerParams(
            dimension_semantics=("parallel", "parallel"),
            vmem_limit_bytes=_vmem_limit_bytes(tT, C, I, i_chunk, kernel_size,
                                               mm_bytes, x_bytes, vmem_cap)),
    )(x_cl_p, lhalo, rhalo, params["w_dw"], params["b_dw"].reshape(1, C),
      w1f, b1f, w2f, b2f)

    return out_cl[:, :T, :] if T_pad != T else out_cl


def convnext_block(x, params, *, kernel_size, padding, eps=1e-6,
                   time_tile=None, matmul_dtype=jnp.bfloat16,
                   i_chunk=None, gelu_approx=False):
    """x: (B, C, T) float32 (PyTorch NCW). Returns (B, C, T)."""
    x_cl = jnp.transpose(x, (0, 2, 1))
    out_cl = convnext_block_channels_last(
        x_cl, params, kernel_size=kernel_size, padding=padding, eps=eps,
        time_tile=time_tile, matmul_dtype=matmul_dtype, i_chunk=i_chunk,
        gelu_approx=gelu_approx)
    return jnp.transpose(out_cl, (0, 2, 1))


# ----------------------------------------------------------------------------
# Pure-JAX reference (mirrors the PyTorch forward) and parameter construction
# ----------------------------------------------------------------------------
def reference_forward(x, params, *, kernel_size, padding, eps=1e-6):
    B, C, T = x.shape
    x_cl = jnp.transpose(x, (0, 2, 1))
    x_pad = jnp.pad(x_cl, ((0, 0), (padding, padding), (0, 0)))
    acc = jnp.zeros((B, T, C), jnp.float32)
    for k in range(kernel_size):
        acc = acc + x_pad[:, k:k + T, :] * params["w_dw"][k, :]
    acc = acc + params["b_dw"][0]
    mean = jnp.mean(acc, axis=-1, keepdims=True)
    var = jnp.mean((acc - mean) ** 2, axis=-1, keepdims=True)
    xn = (acc - mean) / jnp.sqrt(var + eps)
    xn = xn * params["ln_w"][0] + params["ln_b"][0]
    h = xn @ params["w1"] + params["b1"][0]
    g = 0.5 * h * (1.0 + lax.erf(h / jnp.sqrt(2.0)))
    y = g @ params["w2"] + params["b2"][0]
    y = params["gamma"][0] * y
    out = x_cl + y
    return jnp.transpose(out, (0, 2, 1))


def make_params(key, dim, intermediate_dim, kernel_size, layer_scale_init_value):
    ks = jax.random.split(key, 8)
    # PyTorch dwconv weight is (C, 1, K); stored transposed as (K, C).
    w_dw = 0.1 * jax.random.normal(ks[0], (kernel_size, dim), jnp.float32)
    b_dw = 0.1 * jax.random.normal(ks[1], (1, dim), jnp.float32)
    # Non-trivial LN affine so the wrapper-side folding is actually exercised.
    ln_w = 1.0 + 0.1 * jax.random.normal(ks[6], (1, dim), jnp.float32)
    ln_b = 0.05 * jax.random.normal(ks[7], (1, dim), jnp.float32)
    # PyTorch Linear weight is (out, in); stored transposed (in, out) for x @ W.
    w1 = 0.1 * jax.random.normal(ks[2], (dim, intermediate_dim), jnp.float32)
    b1 = 0.1 * jax.random.normal(ks[3], (1, intermediate_dim), jnp.float32)
    w2 = 0.1 * jax.random.normal(ks[4], (intermediate_dim, dim), jnp.float32)
    b2 = 0.1 * jax.random.normal(ks[5], (1, dim), jnp.float32)
    gamma = layer_scale_init_value * jnp.ones((1, dim), jnp.float32)
    return dict(w_dw=w_dw, b_dw=b_dw, ln_w=ln_w, ln_b=ln_b,
                w1=w1, b1=b1, w2=w2, b2=b2, gamma=gamma)


if __name__ == "__main__":
    # ConvNeXtBlock(dim=8, intermediate_dim=32, kernel_size=7, padding=3,
    # layer_scale_init_value=1/8); x: (B=2, C=8, T=30).  T=30 deliberately
    # exercises the padded-tail path (T is not a multiple of the tile).
    B, C, T = 2, 8, 30
    intermediate_dim = 32
    kernel_size, padding = 7, 3
    layer_scale_init_value = 1.0 / 8.0

    key = jax.random.PRNGKey(0)
    kx, kp = jax.random.split(key)
    x = jax.random.normal(kx, (B, C, T), jnp.float32)
    params = make_params(kp, C, intermediate_dim, kernel_size, layer_scale_init_value)

    ref = reference_forward(x, params, kernel_size=kernel_size, padding=padding)

    # f32 MXU-operand path with a small explicit tile: exercises the multi-tile
    # grid, halos, the affine fold and the masked tail; tight tolerance.
    out_f32 = convnext_block(x, params, kernel_size=kernel_size, padding=padding,
                             time_tile=8, matmul_dtype=jnp.float32)
    out_f32 = jax.block_until_ready(out_f32)
    assert out_f32.shape == (B, C, T)
    assert jnp.allclose(out_f32, ref, atol=1e-4, rtol=1e-4), "f32 path mismatch"

    # Default path: bf16 MXU operands (f32 accumulation), auto-picked tile
    # (single tile here), generation-aware VMEM limit.  Looser tolerance.
    out_def = convnext_block(x, params, kernel_size=kernel_size, padding=padding)
    out_def = jax.block_until_ready(out_def)
    assert out_def.shape == (B, C, T)
    assert jnp.allclose(out_def, ref, atol=5e-2, rtol=5e-2), "bf16 path mismatch"

    # tanh-approx GELU flag (EUP path): just verify it lowers and runs.
    out_tanh = convnext_block(x, params, kernel_size=kernel_size, padding=padding,
                              gelu_approx=True)
    out_tanh = jax.block_until_ready(out_tanh)
    assert bool(jnp.all(jnp.isfinite(out_tanh)))

    print("KERNEL_OK")
</pallas_src>

<mosaic_0001>
module attributes {stable_mosaic.version = 11 : i64} {
  func.func @convnext_block_kernel(%arg0: i32, %arg1: i32, %arg2: memref<1x8x8xf32, #tpu.memory_space<vmem>>, %arg3: memref<1x1x8x8xf32, #tpu.memory_space<vmem>>, %arg4: memref<1x1x8x8xf32, #tpu.memory_space<vmem>>, %arg5: memref<7x8xf32, #tpu.memory_space<vmem>>, %arg6: memref<1x8xf32, #tpu.memory_space<vmem>>, %arg7: memref<8x32xf32, #tpu.memory_space<vmem>>, %arg8: memref<1x32xf32, #tpu.memory_space<vmem>>, %arg9: memref<32x8xf32, #tpu.memory_space<vmem>>, %arg10: memref<1x8xf32, #tpu.memory_space<vmem>>, %arg11: memref<1x8x8xf32, #tpu.memory_space<vmem>>) attributes {dimension_semantics = [#tpu.dimension_semantics<parallel>, #tpu.dimension_semantics<parallel>], iteration_bounds = array<i64: 4, 2>, scalar_prefetch = 0 : i64, scratch_operands = 0 : i64, tpu.core_type = #tpu.core_type<tc>, window_params = [{transform_indices = @transform_0, window_bounds = array<i64: 1, 8, 8>}, {transform_indices = @transform_1, window_bounds = array<i64: 1, 1, 8, 8>}, {transform_indices = @transform_2, window_bounds = array<i64: 1, 1, 8, 8>}, {pipeline_mode = #tpu.pipeline_mode<synchronous>, transform_indices = @transform_3, window_bounds = array<i64: 7, 8>}, {pipeline_mode = #tpu.pipeline_mode<synchronous>, transform_indices = @transform_4, window_bounds = array<i64: 1, 8>}, {pipeline_mode = #tpu.pipeline_mode<synchronous>, transform_indices = @transform_5, window_bounds = array<i64: 8, 32>}, {pipeline_mode = #tpu.pipeline_mode<synchronous>, transform_indices = @transform_6, window_bounds = array<i64: 1, 32>}, {pipeline_mode = #tpu.pipeline_mode<synchronous>, transform_indices = @transform_7, window_bounds = array<i64: 32, 8>}, {pipeline_mode = #tpu.pipeline_mode<synchronous>, transform_indices = @transform_8, window_bounds = array<i64: 1, 8>}, {transform_indices = @transform_9, window_bounds = array<i64: 1, 8, 8>}]} {
    %c0 = arith.constant 0 : index
    %c0_0 = arith.constant 0 : index
    %c0_1 = arith.constant 0 : index
    %0 = vector.load %arg2[%c0, %c0_0, %c0_1] : memref<1x8x8xf32, #tpu.memory_space<vmem>>, vector<1x8x8xf32>
    %1 = vector.shape_cast %0 : vector<1x8x8xf32> to vector<8x8xf32>
    %c0_2 = arith.constant 0 : index
    %c0_3 = arith.constant 0 : index
    %c0_4 = arith.constant 0 : index
    %c0_5 = arith.constant 0 : index
    %2 = vector.load %arg3[%c0_2, %c0_3, %c0_4, %c0_5] : memref<1x1x8x8xf32, #tpu.memory_space<vmem>>, vector<1x1x8x8xf32>
    %3 = vector.shape_cast %2 : vector<1x1x8x8xf32> to vector<8x8xf32>
    %c0_6 = arith.constant 0 : index
    %c0_7 = arith.constant 0 : index
    %c0_8 = arith.constant 0 : index
    %c0_9 = arith.constant 0 : index
    %4 = vector.load %arg4[%c0_6, %c0_7, %c0_8, %c0_9] : memref<1x1x8x8xf32, #tpu.memory_space<vmem>>, vector<1x1x8x8xf32>
    %5 = vector.shape_cast %4 : vector<1x1x8x8xf32> to vector<8x8xf32>
    %6 = tpu.concatenate %3, %1, %5 in 0 : vector<8x8xf32>, vector<8x8xf32>, vector<8x8xf32> -> vector<24x8xf32>
    %c0_10 = arith.constant 0 : index
    %c0_11 = arith.constant 0 : index
    %7 = vector.load %arg5[%c0_10, %c0_11] : memref<7x8xf32, #tpu.memory_space<vmem>>, vector<7x8xf32>
    %8 = vector.extract_strided_slice %7 {offsets = [3, 0], sizes = [1, 8], strides = [1, 1]} : vector<7x8xf32> to vector<1x8xf32>
    %9 = vector.shape_cast %8 : vector<1x8xf32> to vector<8xf32>
    %10 = vector.shape_cast %9 : vector<8xf32> to vector<1x8xf32>
    %11 = vector.broadcast %10 : vector<1x8xf32> to vector<8x8xf32>
    %12 = arith.mulf %1, %11 : vector<8x8xf32>
    %13 = vector.extract_strided_slice %6 {offsets = [5, 0], sizes = [8, 8], strides = [1, 1]} : vector<24x8xf32> to vector<8x8xf32>
    %14 = vector.extract_strided_slice %7 {offsets = [0, 0], sizes = [1, 8], strides = [1, 1]} : vector<7x8xf32> to vector<1x8xf32>
    %15 = vector.shape_cast %14 : vector<1x8xf32> to vector<8xf32>
    %16 = vector.shape_cast %15 : vector<8xf32> to vector<1x8xf32>
    %17 = vector.broadcast %16 : vector<1x8xf32> to vector<8x8xf32>
    %18 = arith.mulf %13, %17 : vector<8x8xf32>
    %19 = arith.addf %12, %18 : vector<8x8xf32>
    %20 = vector.extract_strided_slice %6 {offsets = [6, 0], sizes = [8, 8], strides = [1, 1]} : vector<24x8xf32> to vector<8x8xf32>
    %21 = vector.extract_strided_slice %7 {offsets = [1, 0], sizes = [1, 8], strides = [1, 1]} : vector<7x8xf32> to vector<1x8xf32>
    %22 = vector.shape_cast %21 : vector<1x8xf32> to vector<8xf32>
    %23 = vector.shape_cast %22 : vector<8xf32> to vector<1x8xf32>
    %24 = vector.broadcast %23 : vector<1x8xf32> to vector<8x8xf32>
    %25 = arith.mulf %20, %24 : vector<8x8xf32>
    %26 = arith.addf %19, %25 : vector<8x8xf32>
    %27 = vector.extract_strided_slice %6 {offsets = [7, 0], sizes = [8, 8], strides = [1, 1]} : vector<24x8xf32> to vector<8x8xf32>
    %28 = vector.extract_strided_slice %7 {offsets = [2, 0], sizes = [1, 8], strides = [1, 1]} : vector<7x8xf32> to vector<1x8xf32>
    %29 = vector.shape_cast %28 : vector<1x8xf32> to vector<8xf32>
    %30 = vector.shape_cast %29 : vector<8xf32> to vector<1x8xf32>
    %31 = vector.broadcast %30 : vector<1x8xf32> to vector<8x8xf32>
    %32 = arith.mulf %27, %31 : vector<8x8xf32>
    %33 = arith.addf %26, %32 : vector<8x8xf32>
    %34 = vector.extract_strided_slice %6 {offsets = [9, 0], sizes = [8, 8], strides = [1, 1]} : vector<24x8xf32> to vector<8x8xf32>
    %35 = vector.extract_strided_slice %7 {offsets = [4, 0], sizes = [1, 8], strides = [1, 1]} : vector<7x8xf32> to vector<1x8xf32>
    %36 = vector.shape_cast %35 : vector<1x8xf32> to vector<8xf32>
    %37 = vector.shape_cast %36 : vector<8xf32> to vector<1x8xf32>
    %38 = vector.broadcast %37 : vector<1x8xf32> to vector<8x8xf32>
    %39 = arith.mulf %34, %38 : vector<8x8xf32>
    %40 = arith.addf %33, %39 : vector<8x8xf32>
    %41 = vector.extract_strided_slice %6 {offsets = [10, 0], sizes = [8, 8], strides = [1, 1]} : vector<24x8xf32> to vector<8x8xf32>
    %42 = vector.extract_strided_slice %7 {offsets = [5, 0], sizes = [1, 8], strides = [1, 1]} : vector<7x8xf32> to vector<1x8xf32>
    %43 = vector.shape_cast %42 : vector<1x8xf32> to vector<8xf32>
    %44 = vector.shape_cast %43 : vector<8xf32> to vector<1x8xf32>
    %45 = vector.broadcast %44 : vector<1x8xf32> to vector<8x8xf32>
    %46 = arith.mulf %41, %45 : vector<8x8xf32>
    %47 = arith.addf %40, %46 : vector<8x8xf32>
    %48 = vector.extract_strided_slice %6 {offsets = [11, 0], sizes = [8, 8], strides = [1, 1]} : vector<24x8xf32> to vector<8x8xf32>
    %49 = vector.extract_strided_slice %7 {offsets = [6, 0], sizes = [1, 8], strides = [1, 1]} : vector<7x8xf32> to vector<1x8xf32>
    %50 = vector.shape_cast %49 : vector<1x8xf32> to vector<8xf32>
    %51 = vector.shape_cast %50 : vector<8xf32> to vector<1x8xf32>
    %52 = vector.broadcast %51 : vector<1x8xf32> to vector<8x8xf32>
    %53 = arith.mulf %48, %52 : vector<8x8xf32>
    %54 = arith.addf %47, %53 : vector<8x8xf32>
    %c0_12 = arith.constant 0 : index
    %c0_13 = arith.constant 0 : index
    %55 = vector.load %arg6[%c0_12, %c0_13] : memref<1x8xf32, #tpu.memory_space<vmem>>, vector<1x8xf32>
    %56 = vector.shape_cast %55 : vector<1x8xf32> to vector<8xf32>
    %57 = vector.shape_cast %56 : vector<8xf32> to vector<1x8xf32>
    %58 = vector.broadcast %57 : vector<1x8xf32> to vector<8x8xf32>
    %59 = arith.addf %54, %58 : vector<8x8xf32>
    %cst = arith.constant dense<0.000000e+00> : vector<8xf32>
    %60 = vector.multi_reduction <add>, %59, %cst [1] : vector<8x8xf32> to vector<8xf32>
    %61 = vector.shape_cast %60 : vector<8xf32> to vector<8x1xf32>
    %cst_14 = arith.constant 8.000000e+00 : f32
    %62 = vector.broadcast %cst_14 : f32 to vector<8x1xf32>
    %63 = arith.divf %61, %62 : vector<8x1xf32>
    %64 = vector.broadcast %63 : vector<8x1xf32> to vector<8x8xf32>
    %65 = arith.subf %59, %64 : vector<8x8xf32>
    %66 = arith.mulf %65, %65 : vector<8x8xf32>
    %cst_15 = arith.constant dense<0.000000e+00> : vector<8xf32>
    %67 = vector.multi_reduction <add>, %66, %cst_15 [1] : vector<8x8xf32> to vector<8xf32>
    %68 = vector.shape_cast %67 : vector<8xf32> to vector<8x1xf32>
    %cst_16 = arith.constant 8.000000e+00 : f32
    %69 = vector.broadcast %cst_16 : f32 to vector<8x1xf32>
    %70 = arith.divf %68, %69 : vector<8x1xf32>
    %71 = vector.broadcast %63 : vector<8x1xf32> to vector<8x8xf32>
    %72 = arith.subf %59, %71 : vector<8x8xf32>
    %cst_17 = arith.constant 9.99999997E-7 : f32
    %73 = vector.broadcast %cst_17 : f32 to vector<8x1xf32>
    %74 = arith.addf %70, %73 : vector<8x1xf32>
    %75 = math.rsqrt %74 : vector<8x1xf32>
    %76 = vector.broadcast %75 : vector<8x1xf32> to vector<8x8xf32>
    %77 = arith.mulf %72, %76 : vector<8x8xf32>
    %c0_18 = arith.constant 0 : index
    %c0_19 = arith.constant 0 : index
    %78 = vector.load %arg7[%c0_18, %c0_19] : memref<8x32xf32, #tpu.memory_space<vmem>>, vector<8x32xf32>
    %cst_20 = arith.constant dense<0.000000e+00> : vector<8x32xf32>
    %79 = tpu.matmul %77, %78, %cst_20 {dimension_numbers = #tpu.dot_dimension_numbers<[1], [0], [0], [1], [0, 0, 1, 1], [], []>} : vector<8x8xf32>, vector<8x32xf32>, vector<8x32xf32> -> vector<8x32xf32>
    %c0_21 = arith.constant 0 : index
    %c0_22 = arith.constant 0 : index
    %80 = vector.load %arg8[%c0_21, %c0_22] : memref<1x32xf32, #tpu.memory_space<vmem>>, vector<1x32xf32>
    %81 = vector.shape_cast %80 : vector<1x32xf32> to vector<32xf32>
    %82 = vector.shape_cast %81 : vector<32xf32> to vector<1x32xf32>
    %83 = vector.broadcast %82 : vector<1x32xf32> to vector<8x32xf32>
    %84 = arith.addf %79, %83 : vector<8x32xf32>
    %cst_23 = arith.constant 5.000000e-01 : f32
    %85 = vector.broadcast %cst_23 : f32 to vector<8x32xf32>
    %86 = arith.mulf %85, %84 : vector<8x32xf32>
    %cst_24 = arith.constant 0.707106769 : f32
    %87 = vector.broadcast %cst_24 : f32 to vector<8x32xf32>
    %88 = arith.mulf %84, %87 : vector<8x32xf32>
    %89 = math.erf %88 : vector<8x32xf32>
    %cst_25 = arith.constant 1.000000e+00 : f32
    %90 = vector.broadcast %cst_25 : f32 to vector<8x32xf32>
    %91 = arith.addf %90, %89 : vector<8x32xf32>
    %92 = arith.mulf %86, %91 : vector<8x32xf32>
    %c0_26 = arith.constant 0 : index
    %c0_27 = arith.constant 0 : index
    %93 = vector.load %arg9[%c0_26, %c0_27] : memref<32x8xf32, #tpu.memory_space<vmem>>, vector<32x8xf32>
    %cst_28 = arith.constant dense<0.000000e+00> : vector<8x8xf32>
    %94 = tpu.matmul %92, %93, %cst_28 {dimension_numbers = #tpu.dot_dimension_numbers<[1], [0], [0], [1], [0, 0, 1, 1], [], []>} : vector<8x32xf32>, vector<32x8xf32>, vector<8x8xf32> -> vector<8x8xf32>
    %c0_29 = arith.constant 0 : index
    %c0_30 = arith.constant 0 : index
    %95 = vector.load %arg10[%c0_29, %c0_30] : memref<1x8xf32, #tpu.memory_space<vmem>>, vector<1x8xf32>
    %96 = vector.shape_cast %95 : vector<1x8xf32> to vector<8xf32>
    %97 = vector.shape_cast %96 : vector<8xf32> to vector<1x8xf32>
    %98 = vector.broadcast %97 : vector<1x8xf32> to vector<8x8xf32>
    %99 = arith.addf %94, %98 : vector<8x8xf32>
    %100 = arith.addf %1, %99 : vector<8x8xf32>
    %c0_31 = arith.constant 0 : index
    %c0_32 = arith.constant 0 : index
    %c0_33 = arith.constant 0 : index
    %101 = vector.load %arg11[%c0_31, %c0_32, %c0_33] : memref<1x8x8xf32, #tpu.memory_space<vmem>>, vector<1x8x8xf32>
    %102 = vector.shape_cast %101 : vector<1x8x8xf32> to vector<8x8xf32>
    %103 = vector.shape_cast %100 : vector<8x8xf32> to vector<1x8x8xf32>
    tpu.vector_store %arg11[%c0_31, %c0_32, %c0_33], %103 {strides = array<i32>} : memref<1x8x8xf32, #tpu.memory_space<vmem>>, vector<1x8x8xf32>,
    return
  }
  func.func @transform_0(%arg0: i32, %arg1: i32) -> (i32, i32, i32) {
    %c0_i32 = arith.constant 0 : i32
    %c0_i32_0 = arith.constant 0 : i32
    return %arg1, %arg0, %c0_i32 : i32, i32, i32
  }
  func.func @transform_1(%arg0: i32, %arg1: i32) -> (i32, i32, i32, i32) {
    %c0_i32 = arith.constant 0 : i32
    %c0_i32_0 = arith.constant 0 : i32
    %c0_i32_1 = arith.constant 0 : i32
    return %arg1, %arg0, %c0_i32, %c0_i32_0 : i32, i32, i32, i32
  }
  func.func @transform_2(%arg0: i32, %arg1: i32) -> (i32, i32, i32, i32) {
    %c0_i32 = arith.constant 0 : i32
    %c0_i32_0 = arith.constant 0 : i32
    %c0_i32_1 = arith.constant 0 : i32
    return %arg1, %arg0, %c0_i32, %c0_i32_0 : i32, i32, i32, i32
  }
  func.func @transform_3(%arg0: i32, %arg1: i32) -> (i32, i32) {
    %c0_i32 = arith.constant 0 : i32
    %c0_i32_0 = arith.constant 0 : i32
    %c0_i32_1 = arith.constant 0 : i32
    return %c0_i32, %c0_i32_0 : i32, i32
  }
  func.func @transform_4(%arg0: i32, %arg1: i32) -> (i32, i32) {
    %c0_i32 = arith.constant 0 : i32
    %c0_i32_0 = arith.constant 0 : i32
    %c0_i32_1 = arith.constant 0 : i32
    return %c0_i32, %c0_i32_0 : i32, i32
  }
  func.func @transform_5(%arg0: i32, %arg1: i32) -> (i32, i32) {
    %c0_i32 = arith.constant 0 : i32
    %c0_i32_0 = arith.constant 0 : i32
    %c0_i32_1 = arith.constant 0 : i32
    return %c0_i32, %c0_i32_0 : i32, i32
  }
  func.func @transform_6(%arg0: i32, %arg1: i32) -> (i32, i32) {
    %c0_i32 = arith.constant 0 : i32
    %c0_i32_0 = arith.constant 0 : i32
    %c0_i32_1 = arith.constant 0 : i32
    return %c0_i32, %c0_i32_0 : i32, i32
  }
  func.func @transform_7(%arg0: i32, %arg1: i32) -> (i32, i32) {
    %c0_i32 = arith.constant 0 : i32
    %c0_i32_0 = arith.constant 0 : i32
    %c0_i32_1 = arith.constant 0 : i32
    return %c0_i32, %c0_i32_0 : i32, i32
  }
  func.func @transform_8(%arg0: i32, %arg1: i32) -> (i32, i32) {
    %c0_i32 = arith.constant 0 : i32
    %c0_i32_0 = arith.constant 0 : i32
    %c0_i32_1 = arith.constant 0 : i32
    return %c0_i32, %c0_i32_0 : i32, i32
  }
  func.func @transform_9(%arg0: i32, %arg1: i32) -> (i32, i32, i32) {
    %c0_i32 = arith.constant 0 : i32
    %c0_i32_0 = arith.constant 0 : i32
    return %arg1, %arg0, %c0_i32 : i32, i32, i32
  }
}

</mosaic_0001>

<llo_original>
// kernel: tpu_custom_call.1
$region0: #{tpu_custom_call.1}
  #allocation0 [shape = 'u32[]', space=smem, size = 0x4, offset = 0x4, fixed_abs, tag = 'smem constant byte address 0x4 - core index']
  #allocation1 [shape = 'u32[72,128]{1,0:T(1,128)}', space=vmem, size = 0x9000, scoped, tag = 'internal scratch']
  %s0 = inlined_call_operand.vmem [shape: f32[2,32,8], index: 0, kind: input, shape index: {}]
  %s1 = inlined_call_operand.vmem [shape: f32[2,4,8,8], index: 1, kind: input, shape index: {}]
  %s2 = inlined_call_operand.hbm [shape: f32[2,4,8,8], index: 2, kind: input, shape index: {}]
  %s3 = inlined_call_operand.vmem [shape: f32[7,8], index: 3, kind: input, shape index: {}]
  %s4 = inlined_call_operand.vmem [shape: f32[1,8], index: 4, kind: input, shape index: {}]
  %s5 = inlined_call_operand.vmem [shape: f32[8,32], index: 5, kind: input, shape index: {}]
  %s6 = inlined_call_operand.vmem [shape: f32[1,32], index: 6, kind: input, shape index: {}]
  %s7 = inlined_call_operand.vmem [shape: f32[32,8], index: 7, kind: input, shape index: {}]
  %s8 = inlined_call_operand.vmem [shape: f32[1,8], index: 8, kind: input, shape index: {}]
  %s9 = inlined_call_operand.vmem [shape: f32[2,32,8], index: 9, kind: output, shape index: {}]
  %s10 = sld [smem:[#allocation0]]
  $region73: #{tpu_custom_call.1} parent=0
    _
  %s12 = ssub.s32 1, %s10
  %s13 = scalar_select 0, %s12, %s10
  $region1: #{tpu_custom_call.1} parent=0
    #allocation2 [shape = 'u8[8192]{0}', space=vmem, size = 0x2000, scoped, tag = 'input window, operand 2']
    #allocation3 [shape = 's32[2]{0}', space=sflag, size = 0x8, scoped, tag = 'scoped memory for tpu_custom_call.1']
    %14 = vsyncpa [#allocation3], 0
    %s15 = scalar_lea.sflag [#allocation3], 1
    %16 = vsyncpa %s15, 0
    loop: start=0, step=1, limit=10
    $region2: #{tpu_custom_call.1} parent=1 // loop_pre_header
      _
    $region3: #{tpu_custom_call.1} parent=1 // loop_header
      %s18 = sphi 0, %s22
      %p19 = scmp.ge.s32.totalorder %s18, 10
      %s25 = sphi 0, %s37
      %s26 = sphi 0, %s33
      %s27 = sphi 0, %s25
      %s28 = sphi 0, %s26
      %s29 = sphi 0, %s27
      %s30 = sphi 0, %s28
      %s42 = sphi 0, %s44
      %s45 = sphi 0, %s42
      %s46 = sphi 0, %s45
      %s62 = sphi 0, %s46
      %s70 = sphi 0, %s72
      %s73 = sphi 0, %s70
      %s74 = sphi 0, %s73
      %s90 = sphi 0, %s74
      %s98 = sphi 0, %s100
      %s101 = sphi 0, %s98
      %s102 = sphi 0, %s101
      %s118 = sphi 0, %s102
      %s122 = sphi 0, %s122
      %s124 = sphi 0, %s122
      %s125 = sphi 0, %s124
      %s139 = sphi 0, %s125
      %s143 = sphi 0, %s143
      %s145 = sphi 0, %s143
      %s146 = sphi 0, %s145
      %s160 = sphi 0, %s146
      %s164 = sphi 0, %s164
      %s166 = sphi 0, %s164
      %s167 = sphi 0, %s166
      %s181 = sphi 0, %s167
      %s185 = sphi 0, %s185
      %s187 = sphi 0, %s185
      %s188 = sphi 0, %s187
      %s202 = sphi 0, %s188
      %s206 = sphi 0, %s206
      %s208 = sphi 0, %s206
      %s209 = sphi 0, %s208
      %s223 = sphi 0, %s209
      %s227 = sphi 0, %s227
      %s229 = sphi 0, %s227
      %s230 = sphi 0, %s229
      %s244 = sphi 0, %s230
      %s252 = sphi 0, %s254
      %s255 = sphi 0, %s252
      %s256 = sphi 0, %s255
      %s272 = sphi 0, %s256
    $region4: #{tpu_custom_call.1} parent=1 // loop_header_branch
      %21 = sbr.rel (%p19) target = $region8
    $region5: #{tpu_custom_call.1} parent=1 // loop_body
      %s23 = ssub.s32 %s18, 1
      %s24 = ssub.s32 %s18, 2
      %s31 = sadd.s32 1, %s26
      %p32 = scmp.ge.s32.totalorder %s31, 2
      %s33 = scalar_select %p32, 0, %s31
      %s34 = sadd.s32 1, %s25
      %s35 = scalar_select %p32, %s34, %s25
      %p36 = scmp.ge.s32.totalorder %s35, 4
      %s37 = scalar_select %p36, 0, %s35
      %s38 = ssub.s32 %s26, %s33
      %s39 = ssub.s32 %s25, %s37
      %s40 = sor.u32 %s38, %s39
      %p41 = scmp.eq.s32.totalorder %s40, 0
      %s43 = sadd.s32 %s42, 1
      %s44 = scalar_select %p41, %s42, %s43
      %p47 = pneg %p41
      %p48 = scmp.eq.s32.totalorder %s18, 7
      %p49 = por %p47, %p48
      %p50 = scmp.ne.s32.totalorder %s42, %s45
      %p51 = scmp.eq.s32.totalorder %s18, 0
      %p52 = por %p50, %p51
      %p53 = scmp.ne.s32.totalorder %s42, %s45
      %p54 = scmp.eq.s32.totalorder %s23, 7
      %p55 = por %p53, %p54
      %p56 = scmp.ne.s32.totalorder %s45, %s46
      %p57 = scmp.eq.s32.totalorder %s23, 0
      %p58 = por %p56, %p57
      %p59 = scmp.ne.s32.totalorder %s45, %s46
      %p60 = scmp.eq.s32.totalorder %s24, 7
      %p61 = por %p59, %p60
      %p63 = scmp.ne.s32.totalorder %s46, %s62
      %p64 = scmp.eq.s32.totalorder %s24, 0
      %p65 = por %p63, %p64
      %s66 = ssub.s32 %s26, %s33
      %s67 = ssub.s32 %s25, %s37
      %s68 = sor.u32 %s66, %s67
      %p69 = scmp.eq.s32.totalorder %s68, 0
      %s71 = sadd.s32 %s70, 1
      %s72 = scalar_select %p69, %s70, %s71
      %p75 = pneg %p69
      %p76 = scmp.eq.s32.totalorder %s18, 7
      %p77 = por %p75, %p76
      %p78 = scmp.ne.s32.totalorder %s70, %s73
      %p79 = scmp.eq.s32.totalorder %s18, 0
      %p80 = por %p78, %p79
      %p81 = scmp.ne.s32.totalorder %s70, %s73
      %p82 = scmp.eq.s32.totalorder %s23, 7
      %p83 = por %p81, %p82
      %p84 = scmp.ne.s32.totalorder %s73, %s74
      %p85 = scmp.eq.s32.totalorder %s23, 0
      %p86 = por %p84, %p85
      %p87 = scmp.ne.s32.totalorder %s73, %s74
      %p88 = scmp.eq.s32.totalorder %s24, 7
      %p89 = por %p87, %p88
      %p91 = scmp.ne.s32.totalorder %s74, %s90
      %p92 = scmp.eq.s32.totalorder %s24, 0
      %p93 = por %p91, %p92
      %s94 = ssub.s32 %s26, %s33
      %s95 = ssub.s32 %s25, %s37
      %s96 = sor.u32 %s94, %s95
      %p97 = scmp.eq.s32.totalorder %s96, 0
      %s99 = sadd.s32 %s98, 1
      %s100 = scalar_select %p97, %s98, %s99
      %p103 = pneg %p97
      %p104 = scmp.eq.s32.totalorder %s18, 7
      %p105 = por %p103, %p104
      %p106 = scmp.ne.s32.totalorder %s98, %s101
      %p107 = scmp.eq.s32.totalorder %s18, 0
      %p108 = por %p106, %p107
      %p109 = scmp.ne.s32.totalorder %s98, %s101
      %p110 = scmp.eq.s32.totalorder %s23, 7
      %p111 = por %p109, %p110
      %p112 = scmp.ne.s32.totalorder %s101, %s102
      %p113 = scmp.eq.s32.totalorder %s23, 0
      %p114 = por %p112, %p113
      %p115 = scmp.ne.s32.totalorder %s101, %s102
      %p116 = scmp.eq.s32.totalorder %s24, 7
      %p117 = por %p115, %p116
      %p119 = scmp.ne.s32.totalorder %s102, %s118
      %p120 = scmp.eq.s32.totalorder %s24, 0
      %p121 = por %p119, %p120
      %s123 = sadd.s32 %s122, 1
      %p126 = scmp.eq.s32.totalorder %s18, 7
      %p127 = scmp.ne.s32.totalorder %s122, %s124
      %p128 = scmp.eq.s32.totalorder %s18, 0
      %p129 = por %p127, %p128
      %p130 = scmp.ne.s32.totalorder %s122, %s124
      %p131 = scmp.eq.s32.totalorder %s23, 7
      %p132 = por %p130, %p131
      %p133 = scmp.ne.s32.totalorder %s124, %s125
      %p134 = scmp.eq.s32.totalorder %s23, 0
      %p135 = por %p133, %p134
      %p136 = scmp.ne.s32.totalorder %s124, %s125
      %p137 = scmp.eq.s32.totalorder %s24, 7
      %p138 = por %p136, %p137
      %p140 = scmp.ne.s32.totalorder %s125, %s139
      %p141 = scmp.eq.s32.totalorder %s24, 0
      %p142 = por %p140, %p141
      %s144 = sadd.s32 %s143, 1
      %p147 = scmp.eq.s32.totalorder %s18, 7
      %p148 = scmp.ne.s32.totalorder %s143, %s145
      %p149 = scmp.eq.s32.totalorder %s18, 0
      %p150 = por %p148, %p149
      %p151 = scmp.ne.s32.totalorder %s143, %s145
      %p152 = scmp.eq.s32.totalorder %s23, 7
      %p153 = por %p151, %p152
      %p154 = scmp.ne.s32.totalorder %s145, %s146
      %p155 = scmp.eq.s32.totalorder %s23, 0
      %p156 = por %p154, %p155
      %p157 = scmp.ne.s32.totalorder %s145, %s146
      %p158 = scmp.eq.s32.totalorder %s24, 7
      %p159 = por %p157, %p158
      %p161 = scmp.ne.s32.totalorder %s146, %s160
      %p162 = scmp.eq.s32.totalorder %s24, 0
      %p163 = por %p161, %p162
      %s165 = sadd.s32 %s164, 1
      %p168 = scmp.eq.s32.totalorder %s18, 7
      %p169 = scmp.ne.s32.totalorder %s164, %s166
      %p170 = scmp.eq.s32.totalorder %s18, 0
      %p171 = por %p169, %p170
      %p172 = scmp.ne.s32.totalorder %s164, %s166
      %p173 = scmp.eq.s32.totalorder %s23, 7
      %p174 = por %p172, %p173
      %p175 = scmp.ne.s32.totalorder %s166, %s167
      %p176 = scmp.eq.s32.totalorder %s23, 0
      %p177 = por %p175, %p176
      %p178 = scmp.ne.s32.totalorder %s166, %s167
      %p179 = scmp.eq.s32.totalorder %s24, 7
      %p180 = por %p178, %p179
      %p182 = scmp.ne.s32.totalorder %s167, %s181
      %p183 = scmp.eq.s32.totalorder %s24, 0
      %p184 = por %p182, %p183
      %s186 = sadd.s32 %s185, 1
      %p189 = scmp.eq.s32.totalorder %s18, 7
      %p190 = scmp.ne.s32.totalorder %s185, %s187
      %p191 = scmp.eq.s32.totalorder %s18, 0
      %p192 = por %p190, %p191
      %p193 = scmp.ne.s32.totalorder %s185, %s187
      %p194 = scmp.eq.s32.totalorder %s23, 7
      %p195 = por %p193, %p194
      %p196 = scmp.ne.s32.totalorder %s187, %s188
      %p197 = scmp.eq.s32.totalorder %s23, 0
      %p198 = por %p196, %p197
      %p199 = scmp.ne.s32.totalorder %s187, %s188
      %p200 = scmp.eq.s32.totalorder %s24, 7
      %p201 = por %p199, %p200
      %p203 = scmp.ne.s32.totalorder %s188, %s202
      %p204 = scmp.eq.s32.totalorder %s24, 0
      %p205 = por %p203, %p204
      %s207 = sadd.s32 %s206, 1
      %p210 = scmp.eq.s32.totalorder %s18, 7
      %p211 = scmp.ne.s32.totalorder %s206, %s208
      %p212 = scmp.eq.s32.totalorder %s18, 0
      %p213 = por %p211, %p212
      %p214 = scmp.ne.s32.totalorder %s206, %s208
      %p215 = scmp.eq.s32.totalorder %s23, 7
      %p216 = por %p214, %p215
      %p217 = scmp.ne.s32.totalorder %s208, %s209
      %p218 = scmp.eq.s32.totalorder %s23, 0
      %p219 = por %p217, %p218
      %p220 = scmp.ne.s32.totalorder %s208, %s209
      %p221 = scmp.eq.s32.totalorder %s24, 7
      %p222 = por %p220, %p221
      %p224 = scmp.ne.s32.totalorder %s209, %s223
      %p225 = scmp.eq.s32.totalorder %s24, 0
      %p226 = por %p224, %p225
      %s228 = sadd.s32 %s227, 1
      %p231 = scmp.eq.s32.totalorder %s18, 7
      %p232 = scmp.ne.s32.totalorder %s227, %s229
      %p233 = scmp.eq.s32.totalorder %s18, 0
      %p234 = por %p232, %p233
      %p235 = scmp.ne.s32.totalorder %s227, %s229
      %p236 = scmp.eq.s32.totalorder %s23, 7
      %p237 = por %p235, %p236
      %p238 = scmp.ne.s32.totalorder %s229, %s230
      %p239 = scmp.eq.s32.totalorder %s23, 0
      %p240 = por %p238, %p239
      %p241 = scmp.ne.s32.totalorder %s229, %s230
      %p242 = scmp.eq.s32.totalorder %s24, 7
      %p243 = por %p241, %p242
      %p245 = scmp.ne.s32.totalorder %s230, %s244
      %p246 = scmp.eq.s32.totalorder %s24, 0
      %p247 = por %p245, %p246
      %s248 = ssub.s32 %s26, %s33
      %s249 = ssub.s32 %s25, %s37
      %s250 = sor.u32 %s248, %s249
      %p251 = scmp.eq.s32.totalorder %s250, 0
      %s253 = sadd.s32 %s252, 1
      %s254 = scalar_select %p251, %s252, %s253
      %p257 = pneg %p251
      %p258 = scmp.eq.s32.totalorder %s18, 7
      %p259 = por %p257, %p258
      %p260 = scmp.ne.s32.totalorder %s252, %s255
      %p261 = scmp.eq.s32.totalorder %s18, 0
      %p262 = por %p260, %p261
      %p263 = scmp.ne.s32.totalorder %s252, %s255
      %p264 = scmp.eq.s32.totalorder %s23, 7
      %p265 = por %p263, %p264
      %p266 = scmp.ne.s32.totalorder %s255, %s256
      %p267 = scmp.eq.s32.totalorder %s23, 0
      %p268 = por %p266, %p267
      %p269 = scmp.ne.s32.totalorder %s255, %s256
      %p270 = scmp.eq.s32.totalorder %s24, 7
      %p271 = por %p269, %p270
      %p273 = scmp.ne.s32.totalorder %s256, %s272
      %p274 = scmp.eq.s32.totalorder %s24, 0
      %p275 = por %p273, %p274
      %p276 = scmp.le.s32.totalorder 1, %s18
      %p277 = scmp.lt.s32.totalorder %s18, 9
      %p278 = pnand %p276, %p277
      %p279 = pneg %p278
      // Predicated region
      $region9: #{tpu_custom_call.1} parent=5 // pred_check
        _
      $region10: #{tpu_custom_call.1} parent=5 // pred_check_branch
        %281 = sbr.rel (%p278) target = $region12
      $region11: #{tpu_custom_call.1} parent=5 // pred_region
        %s282 = ssub.s32 %s18, 1
        // Predicated region
        $region13: #{tpu_custom_call.1} parent=11 // pred_check
          %p283 = pneg %p135
        $region14: #{tpu_custom_call.1} parent=11 // pred_check_branch
          %285 = sbr.rel (%p283) target = $region16
        $region15: #{tpu_custom_call.1} parent=11 // pred_region
          _
        $region16: #{tpu_custom_call.1} parent=11 // pred_fallthru
          _
        // Predicated region
        $region17: #{tpu_custom_call.1} parent=11 // pred_check
          %p286 = pneg %p156
        $region18: #{tpu_custom_call.1} parent=11 // pred_check_branch
          %288 = sbr.rel (%p286) target = $region20
        $region19: #{tpu_custom_call.1} parent=11 // pred_region
          _
        $region20: #{tpu_custom_call.1} parent=11 // pred_fallthru
          _
        // Predicated region
        $region21: #{tpu_custom_call.1} parent=11 // pred_check
          %p289 = pneg %p177
        $region22: #{tpu_custom_call.1} parent=11 // pred_check_branch
          %291 = sbr.rel (%p289) target = $region24
        $region23: #{tpu_custom_call.1} parent=11 // pred_region
          _
        $region24: #{tpu_custom_call.1} parent=11 // pred_fallthru
          _
        // Predicated region
        $region25: #{tpu_custom_call.1} parent=11 // pred_check
          %p292 = pneg %p198
        $region26: #{tpu_custom_call.1} parent=11 // pred_check_branch
          %294 = sbr.rel (%p292) target = $region28
        $region27: #{tpu_custom_call.1} parent=11 // pred_region
          _
        $region28: #{tpu_custom_call.1} parent=11 // pred_fallthru
          _
        // Predicated region
        $region29: #{tpu_custom_call.1} parent=11 // pred_check
          %p295 = pneg %p219
        $region30: #{tpu_custom_call.1} parent=11 // pred_check_branch
          %297 = sbr.rel (%p295) target = $region32
        $region31: #{tpu_custom_call.1} parent=11 // pred_region
          _
        $region32: #{tpu_custom_call.1} parent=11 // pred_fallthru
          _
        // Predicated region
        $region33: #{tpu_custom_call.1} parent=11 // pred_check
          %p298 = pneg %p240
        $region34: #{tpu_custom_call.1} parent=11 // pred_check_branch
          %300 = sbr.rel (%p298) target = $region36
        $region35: #{tpu_custom_call.1} parent=11 // pred_region
          _
        $region36: #{tpu_custom_call.1} parent=11 // pred_fallthru
          _
      $region12: #{tpu_custom_call.1} parent=5 // pred_fallthru
        _
      %p301 = scmp.lt.s32.totalorder %s18, 8
      // Predicated region
      $region37: #{tpu_custom_call.1} parent=5 // pred_check
        %p302 = pneg %p301
      $region38: #{tpu_custom_call.1} parent=5 // pred_check_branch
        %304 = sbr.rel (%p302) target = $region40
      $region39: #{tpu_custom_call.1} parent=5 // pred_region
        // Predicated region
        $region41: #{tpu_custom_call.1} parent=39 // pred_check
          %p305 = pneg %p52
        $region42: #{tpu_custom_call.1} parent=39 // pred_check_branch
          %307 = sbr.rel (%p305) target = $region44
        $region43: #{tpu_custom_call.1} parent=39 // pred_region
          %p308 = scmp.lt.s32.totalorder %s26, 1
          %s309 = scalar_select %p308, %s26, 1
          %p310 = scmp.lt.s32.totalorder %s25, 3
          %s311 = scalar_select %p310, %s25, 3
          %s312 = smul.addr %s309, 4
          %s313 = sadd.s32 %s311, %s312
          %s314 = smul.addr %s313, 8
          %s315 = scalar_lea.vmem %s0, %s314
        $region44: #{tpu_custom_call.1} parent=39 // pred_fallthru
          _
        // Predicated region
        $region45: #{tpu_custom_call.1} parent=39 // pred_check
          %p316 = pneg %p80
        $region46: #{tpu_custom_call.1} parent=39 // pred_check_branch
          %318 = sbr.rel (%p316) target = $region48
        $region47: #{tpu_custom_call.1} parent=39 // pred_region
          %p319 = scmp.lt.s32.totalorder %s26, 1
          %s320 = scalar_select %p319, %s26, 1
          %p321 = scmp.lt.s32.totalorder %s25, 3
          %s322 = scalar_select %p321, %s25, 3
          %s323 = smul.addr %s320, 4
          %s324 = sadd.s32 %s322, %s323
          %s325 = smul.addr %s324, 8
          %s326 = scalar_lea.vmem %s1, %s325
        $region48: #{tpu_custom_call.1} parent=39 // pred_fallthru
          _
        // Predicated region
        $region49: #{tpu_custom_call.1} parent=39 // pred_check
          %p327 = pneg %p108
        $region50: #{tpu_custom_call.1} parent=39 // pred_check_branch
          %329 = sbr.rel (%p327) target = $region52
        $region51: #{tpu_custom_call.1} parent=39 // pred_region
          %s330 = sand.u32 %s98, 1
          %s331 = scalar_lea.sflag [#allocation3], %s330
          %s332 = sand.u32 %s98, 1
          %s333 = smul.addr %s332, 8
          %s334 = scalar_lea.vmem [#allocation2], %s333
          %336 = vsyncadd %s331, 0
          %s337 = smul.addr %s26, 4
          %s338 = sadd.s32 %s25, %s337
          %s339 = smul.addr %s338, 8
          %s340 = scalar_lea.hbm %s2, %s339
          %s342 = sshll.u32 %s340, 4
          %s343 = int_to_ptr.hbm [resolvable:$true] %s342
          %s344 = sshll.u32 %s334, 4
          %s345 = int_to_ptr.vmem [resolvable:$true] %s344
          %347 = dma.hbm_to_vmem [thread:$0]  %s343, 128, %s345, %s331
        $region52: #{tpu_custom_call.1} parent=39 // pred_fallthru
          _
      $region40: #{tpu_custom_call.1} parent=5 // pred_fallthru
        _
      %p348 = scmp.le.s32.totalorder 1, %s18
      %p349 = scmp.lt.s32.totalorder %s18, 9
      %p350 = pnand %p348, %p349
      %p351 = pneg %p350
      // Predicated region
      $region53: #{tpu_custom_call.1} parent=5 // pred_check
        _
      $region54: #{tpu_custom_call.1} parent=5 // pred_check_branch
        %353 = sbr.rel (%p350) target = $region56
      $region55: #{tpu_custom_call.1} parent=5 // pred_region
        %s354 = ssub.s32 %s18, 1
        %s355 = sand.u32 %s101, 1
        %s356 = scalar_lea.sflag [#allocation3], %s355
        %s357 = sand.u32 %s101, 1
        %s358 = smul.addr %s357, 8
        %s359 = scalar_lea.vmem [#allocation2], %s358
        // Predicated region
        $region57: #{tpu_custom_call.1} parent=55 // pred_check
          %p360 = pneg %p114
        $region58: #{tpu_custom_call.1} parent=55 // pred_check_branch
          %362 = sbr.rel (%p360) target = $region60
        $region59: #{tpu_custom_call.1} parent=55 // pred_region
          %364 = dma.done %s356, 128
        $region60: #{tpu_custom_call.1} parent=55 // pred_fallthru
          _
        %p365 = scmp.lt.s32.totalorder %s28, 1
        %s366 = scalar_select %p365, %s28, 1
        %p367 = scmp.lt.s32.totalorder %s27, 3
        %s368 = scalar_select %p367, %s27, 3
        %s369 = smul.addr %s366, 4
        %s370 = sadd.s32 %s368, %s369
        %s371 = smul.addr %s370, 8
        %s372 = scalar_lea.vmem %s0, %s371
        %p373 = pneg %p58
        %p374 = pneg %p55
        %p375 = scmp.lt.s32.totalorder %s28, 1
        %s376 = scalar_select %p375, %s28, 1
        %p377 = scmp.lt.s32.totalorder %s27, 3
        %s378 = scalar_select %p377, %s27, 3
        %s379 = smul.addr %s376, 4
        %s380 = sadd.s32 %s378, %s379
        %s381 = smul.addr %s380, 8
        %s382 = scalar_lea.vmem %s1, %s381
        %p383 = pneg %p86
        %p384 = pneg %p83
        %s385 = sand.u32 %s101, 1
        %s386 = scalar_lea.sflag [#allocation3], %s385
        %s387 = sand.u32 %s101, 1
        %s388 = smul.addr %s387, 8
        %s389 = scalar_lea.vmem [#allocation2], %s388
        %p390 = pneg %p114
        %p391 = pneg %p111
        %p392 = pneg %p135
        %p393 = pneg %p132
        %p394 = pneg %p156
        %p395 = pneg %p153
        %p396 = pneg %p177
        %p397 = pneg %p174
        %p398 = pneg %p198
        %p399 = pneg %p195
        %p400 = pneg %p219
        %p401 = pneg %p216
        %p402 = pneg %p240
        %p403 = pneg %p237
        %p404 = pneg %p268
        %p405 = pneg %p265
        %p406 = scmp.lt.s32.totalorder %s28, 1
        %s407 = scalar_select %p406, %s28, 1
        %p408 = scmp.lt.s32.totalorder %s27, 3
        %s409 = scalar_select %p408, %s27, 3
        %s410 = smul.addr %s407, 4
        %s411 = sadd.s32 %s409, %s410
        %s412 = smul.addr %s411, 8
        %s413 = scalar_lea.vmem %s9, %s412
        %p414 = scmp.lt.s32.totalorder %s28, 1
        %s415 = scalar_select %p414, %s28, 1
        %p416 = scmp.lt.s32.totalorder %s27, 3
        %s417 = scalar_select %p416, %s27, 3
        %s418 = smul.addr %s415, 4
        %s419 = sadd.s32 %s417, %s418
        %s420 = smul.addr %s419, 8
        %s421 = scalar_lea.vmem %s0, %s420
        %p422 = scmp.lt.s32.totalorder %s28, 1
        %s423 = scalar_select %p422, %s28, 1
        %p424 = scmp.lt.s32.totalorder %s27, 3
        %s425 = scalar_select %p424, %s27, 3
        %s426 = smul.addr %s423, 4
        %s427 = sadd.s32 %s425, %s426
        %s428 = smul.addr %s427, 8
        %s429 = scalar_lea.vmem %s1, %s428
        %p430 = scmp.lt.s32.totalorder %s28, 1
        %s431 = scalar_select %p430, %s28, 1
        %p432 = scmp.lt.s32.totalorder %s27, 3
        %s433 = scalar_select %p432, %s27, 3
        %s434 = smul.addr %s431, 4
        %s435 = sadd.s32 %s433, %s434
        %s436 = smul.addr %s435, 8
        %s437 = scalar_lea.vmem %s9, %s436
        %v438 = vld [vmem:[%s421] sm:$0xff]
        %v439 = vld [vmem:[%s429] sm:$0xff]
        %v440 = vld [vmem:[%s359] sm:$0xff]
        %v441 = vld [vmem:[%s3] sm:$0x7f]
        %v442 = vperm.slane %v441, 3
        %v443 = vmul.f32 %v438, %v442
        %v444 = vperm.slane %v441, 0
        %v445 = vmul.f32 %v439, %v444
        %v446 = vmul.f32 %v438, %v444
        %vm449 = vcmask 1042432
        %v450 = vrot.slane %v445, 5
        %v451 = vrot.slane %v446, 5
        %v452 = vsel %vm449, %v450, %v451
        %v454 = vadd.f32 %v443, %v452
        %v455 = vperm.slane %v441, 1
        %v456 = vmul.f32 %v439, %v455
        %v457 = vmul.f32 %v438, %v455
        %vm460 = vcmask 1041408
        %v461 = vrot.slane %v456, 6
        %v462 = vrot.slane %v457, 6
        %v463 = vsel %vm460, %v461, %v462
        %v465 = vadd.f32 %v454, %v463
        %v466 = vperm.slane %v441, 2
        %v467 = vmul.f32 %v439, %v466
        %v468 = vmul.f32 %v438, %v466
        %vm471 = vcmask 1040384
        %v472 = vrot.slane %v467, 7
        %v473 = vrot.slane %v468, 7
        %v474 = vsel %vm471, %v472, %v473
        %v476 = vadd.f32 %v465, %v474
        %v477 = vperm.slane %v441, 4
        %v478 = vmul.f32 %v438, %v477
        %v479 = vmul.f32 %v440, %v477
        %vm482 = vcmask 1046528
        %v483 = vrot.slane %v478, 1
        %v484 = vrot.slane %v479, 1
        %v485 = vsel %vm482, %v483, %v484
        %v487 = vadd.f32 %v476, %v485
        %v488 = vperm.slane %v441, 5
        %v489 = vmul.f32 %v438, %v488
        %v490 = vmul.f32 %v440, %v488
        %vm493 = vcmask 1045504
        %v494 = vrot.slane %v489, 2
        %v495 = vrot.slane %v490, 2
        %v496 = vsel %vm493, %v494, %v495
        %v498 = vadd.f32 %v487, %v496
        %v499 = vperm.slane %v441, 6
        %v500 = vmul.f32 %v438, %v499
        %v501 = vmul.f32 %v440, %v499
        %vm504 = vcmask 1044480
        %v505 = vrot.slane %v500, 3
        %v506 = vrot.slane %v501, 3
        %v507 = vsel %vm504, %v505, %v506
        %v509 = vadd.f32 %v498, %v507
        %v510 = vld [vmem:[%s4] sm:$0x1]
        %v512 = vperm.slane %v510, 0
        %v514 = vadd.f32 %v509, %v512
        %vm515 = vcmask 64512
        %v516 = vsel %vm515, %v514, 0.0
        %517 = vadd.xlane.f32.xlu0 %v516
        %v518 = vpop.xlane.xlu0 %517
        %v519 = vrcp.pop 8.0
        %v520 = vmul.f32 8.0, %v519
        %v521 = vsub.f32 1.0, %v520
        %v522 = vmul.f32 %v519, %v521
        %v523 = vadd.f32 %v519, %v522
        %vm524 = vweird.f32 %v519
        %v525 = vsel %vm524, %v519, %v523
        %v526 = vmul.f32 %v518, %v525
        %v527 = vsub.f32 %v514, %v526
        %v528 = vmul.f32 %v527, %v527
        %v529 = vsel %vm515, %v528, 0.0
        %530 = vadd.xlane.f32.xlu0 %v529
        %v531 = vpop.xlane.xlu0 %530
        %v532 = vmul.f32 %v531, %v525
        %v533 = vadd.f32 %v532, 1e-06
        %v534 = vrsqrt.pop %v533
        %v535 = vmul.f32 %v534, %v533
        %v536 = vmul.f32 %v535, %v534
        %v537 = vmul.f32 0.5, %v536
        %v538 = vsub.f32 1.5, %v537
        %v539 = vmul.f32 %v534, %v538
        %vm540 = vweird.f32 %v533
        %vm541 = vweird.f32 %v534
        %vm542 = vmor %vm540, %vm541
        %v543 = vsel %vm542, %v534, %v539
        %v544 = vmul.f32 %v527, %v543
        %v545 = vld [vmem:[%s5] sm:$0xff]
        %v546 = vld [vmem:[%s6] sm:$0x1]
        %v548 = vperm.slane %v546, 0
        %v551 = vsel %vm515, %v544, 0
        %553 = vmatpush.msra.mxu0 0.0
        %554 = vmatpush.msra.mxu0 0.0
        %555 = vmatpush.msra.mxu0 0.0
        %556 = vmatpush.msra.mxu0 0.0
        %557 = vmatpush.msra.mxu0 0.0
        %558 = vmatpush.msra.mxu0 0.0
        %559 = vmatpush.msra.mxu0 0.0
        %560 = vmatpush.msra.mxu0 0.0
        %561 = vmatpush.msra.mxu0 0.0
        %562 = vmatpush.msra.mxu0 0.0
        %563 = vmatpush.msra.mxu0 0.0
        %564 = vmatpush.msra.mxu0 0.0
        %565 = vmatpush.msra.mxu0 0.0
        %566 = vmatpush.msra.mxu0 0.0
        %567 = vmatpush.msra.mxu0 0.0
        %568 = vmatpush.msra.mxu0 %v545
        %569 = vmatmul.f32.gmra.mxu0 %v551
        %v570 = vpop.f32.mrf.mxu0
        %v571 = vadd.f32 %v548, %v570
        %572 = vdwg.mxu0
        %v573 = vmul.f32 %v571, 0.5
        %v574 = vmul.f32 %v571, 0.70710677
        %v575 = vmul.f32 %v574, %v574
        %v576 = vmin.f32 16.0, %v575
        %v577 = vmul.f32 %v576, 2.1237322e-06
        %v578 = vadd.f32 %v577, 0.00028619796
        %v579 = vmul.f32 %v576, %v578
        %v580 = vadd.f32 %v579, 0.0036580483
        %v581 = vmul.f32 %v576, %v580
        %v582 = vadd.f32 %v581, 0.05243302
        %v583 = vmul.f32 %v576, %v582
        %v584 = vadd.f32 %v583, 0.18741608
        %v585 = vmul.f32 %v576, %v584
        %v586 = vadd.f32 %v585, 1.1283791
        %v587 = vmul.f32 %v574, %v586
        %v588 = vmul.f32 %v576, 3.8918573e-05
        %v589 = vadd.f32 %v588, 0.001143296
        %v590 = vmul.f32 %v576, %v589
        %v591 = vadd.f32 %v590, 0.014752088
        %v592 = vmul.f32 %v576, %v591
        %v593 = vadd.f32 %v592, 0.112945676
        %v594 = vmul.f32 %v576, %v593
        %v595 = vadd.f32 %v594, 0.4994258
        %v596 = vmul.f32 %v576, %v595
        %v597 = vadd.f32 %v596, 1.0
        %v598 = vrcp.pop %v597
        %v599 = vmul.f32 %v597, %v598
        %v600 = vsub.f32 1.0, %v599
        %v601 = vmul.f32 %v598, %v600
        %v602 = vadd.f32 %v598, %v601
        %vm603 = vweird.f32 %v597
        %vm604 = vweird.f32 %v598
        %vm605 = vmor %vm603, %vm604
        %v606 = vsel %vm605, %v598, %v602
        %v607 = vand.u32 2147483647, %v597
        %vm608 = vcmp.eq.f32.partialorder %v607, 8.507059e+37
        %v609 = vand.u32 %v597, 2147483648
        %v610 = vor.u32 1.1754944e-38, %v609
        %v611 = vsel %vm608, %v610, %v606
        %v612 = vmul.f32 %v587, %v611
        %v613 = vmin.f32 %v612, 1.0
        %v614 = vmax.f32 %v613, -1.0
        %v615 = vadd.f32 %v614, 1.0
        %v616 = vmul.f32 %v573, %v615
        %v617 = vld [vmem:[%s7] sm:$0xff]
        %v618 = vld [vmem:[%s7 + $0x8] sm:$0xff]
        %v619 = vld [vmem:[%s7 + $0x10] sm:$0xff]
        %v620 = vld [vmem:[%s7 + $0x18] sm:$0xff]
        %v621 = vld [vmem:[%s8] sm:$0x1]
        %v623 = vperm.slane %v621, 0
        %vm625 = vcmask 261120
        %v627 = vsel %vm625, %v616, 0
        %629 = vmatpush.msra.mxu0 0.0
        %630 = vmatpush.msra.mxu0 0.0
        %631 = vmatpush.msra.mxu0 0.0
        %632 = vmatpush.msra.mxu0 0.0
        %633 = vmatpush.msra.mxu0 0.0
        %634 = vmatpush.msra.mxu0 0.0
        %635 = vmatpush.msra.mxu0 0.0
        %636 = vmatpush.msra.mxu0 0.0
        %637 = vmatpush.msra.mxu0 0.0
        %638 = vmatpush.msra.mxu0 0.0
        %639 = vmatpush.msra.mxu0 0.0
        %640 = vmatpush.msra.mxu0 0.0
        %641 = vmatpush.msra.mxu0 %v620
        %642 = vmatpush.msra.mxu0 %v619
        %643 = vmatpush.msra.mxu0 %v618
        %644 = vmatpush.msra.mxu0 %v617
        %645 = vmatmul.f32.gmra.mxu0 %v627
        %v646 = vpop.f32.mrf.mxu0
        %v647 = vadd.f32 %v623, %v646
        %648 = vdwg.mxu0
        %v649 = vadd.f32 %v438, %v647
        %650 = vst.msk [vmem:[%s437] sm:$0xff] %vm515, %v649
        %p651 = scmp.lt.s32.totalorder %s28, 1
        %s652 = scalar_select %p651, %s28, 1
        %p653 = scmp.lt.s32.totalorder %s27, 3
        %s654 = scalar_select %p653, %s27, 3
        %s655 = smul.addr %s652, 4
        %s656 = sadd.s32 %s654, %s655
        %s657 = smul.addr %s656, 8
        %s658 = scalar_lea.vmem %s9, %s657
        // Predicated region
        $region61: #{tpu_custom_call.1} parent=55 // pred_check
          %p659 = pneg %p265
        $region62: #{tpu_custom_call.1} parent=55 // pred_check_branch
          %661 = sbr.rel (%p659) target = $region64
        $region63: #{tpu_custom_call.1} parent=55 // pred_region
          _
        $region64: #{tpu_custom_call.1} parent=55 // pred_fallthru
          _
      $region56: #{tpu_custom_call.1} parent=5 // pred_fallthru
        _
      %p662 = scmp.le.s32.totalorder 2, %s18
      // Predicated region
      $region65: #{tpu_custom_call.1} parent=5 // pred_check
        %p663 = pneg %p662
      $region66: #{tpu_custom_call.1} parent=5 // pred_check_branch
        %665 = sbr.rel (%p663) target = $region68
      $region67: #{tpu_custom_call.1} parent=5 // pred_region
        %s666 = ssub.s32 %s18, 2
        // Predicated region
        $region69: #{tpu_custom_call.1} parent=67 // pred_check
          %p667 = pneg %p271
        $region70: #{tpu_custom_call.1} parent=67 // pred_check_branch
          %669 = sbr.rel (%p667) target = $region72
        $region71: #{tpu_custom_call.1} parent=67 // pred_region
          %p670 = scmp.lt.s32.totalorder %s30, 1
          %s671 = scalar_select %p670, %s30, 1
          %p672 = scmp.lt.s32.totalorder %s29, 3
          %s673 = scalar_select %p672, %s29, 3
          %s674 = smul.addr %s671, 4
          %s675 = sadd.s32 %s673, %s674
          %s676 = smul.addr %s675, 8
          %s677 = scalar_lea.vmem %s9, %s676
        $region72: #{tpu_custom_call.1} parent=67 // pred_fallthru
          _
      $region68: #{tpu_custom_call.1} parent=5 // pred_fallthru
        _
    $region6: #{tpu_custom_call.1} parent=1 // loop_footer
      %s22 = sadd.s32 1, %s18
    $region7: #{tpu_custom_call.1} parent=1 // loop_footer_branch
      %17 = sbr.rel target = $region3
    $region8: #{tpu_custom_call.1} parent=1 // loop_exit
      _
    %678 = vsyncpa [#allocation3], 1
    %s679 = scalar_lea.sflag [#allocation3], 1
    %680 = vsyncpa %s679, 1

</llo_original>
